<compile_context>
chip_gen: v7x
topology: tpu7x:2x2x1
jax: 0.10.0
libtpu: 0.0.40
codegen_flags: <defaults>
</compile_context>

<pallas_src>
import jax
import jax.numpy as jnp
from jax.experimental import pallas as pl
from jax.experimental.pallas import tpu as pltpu

LANE = 128
SUBLANE_BF16 = 16  # one bf16 vreg holds 16 sublanes x 128 lanes


def _round_up(x, m):
    return (x + m - 1) // m * m


def dqn_kernel(x_ref, w1_ref, b1_ref, w2_ref, b2_ref, w3_ref, b3_ref, out_ref):
    # fc1: bf16 operands on the MXU (small-K contraction), f32 accumulation.
    h1 = jnp.dot(x_ref[...], w1_ref[...], preferred_element_type=jnp.float32)
    h1 = jnp.maximum(h1 + b1_ref[...], 0.0).astype(jnp.bfloat16)
    # fc2 + ReLU
    h2 = jnp.dot(h1, w2_ref[...], preferred_element_type=jnp.float32)
    h2 = jnp.maximum(h2 + b2_ref[...], 0.0).astype(jnp.bfloat16)
    # fc3: raw action values, stored at the true n_actions width in f32.
    a = jnp.dot(h2, w3_ref[...], preferred_element_type=jnp.float32)
    out_ref[...] = (a + b3_ref[...]).astype(out_ref.dtype)


def init_params(key, input_dim, fc1_dims, fc2_dims, n_actions):
    """nn.Linear-style init U(-1/sqrt(in), 1/sqrt(in)); weights stored (in, out),
    biases (1, out), all f32 (the "master" params, as in the PyTorch module)."""
    ks = jax.random.split(key, 6)

    def lin(kw, kb, fan_in, fan_out):
        bound = 1.0 / jnp.sqrt(fan_in)
        w = jax.random.uniform(kw, (fan_in, fan_out), jnp.float32, -bound, bound)
        b = jax.random.uniform(kb, (1, fan_out), jnp.float32, -bound, bound)
        return w, b

    w1, b1 = lin(ks[0], ks[1], input_dim, fc1_dims)
    w2, b2 = lin(ks[2], ks[3], fc1_dims, fc2_dims)
    w3, b3 = lin(ks[4], ks[5], fc2_dims, n_actions)
    return {"w1": w1, "b1": b1, "w2": w2, "b2": b2, "w3": w3, "b3": b3}


def prepare_params(params):
    """One-time pad + cast of the parameters into the kernel layout.

    Hidden dims are zero-padded to a lane multiple (128) for lane-dense inner
    matmuls; the input dim and n_actions keep their true sizes so the per-step
    state DMA and output writeback are not lane-amplified.  Call this once per
    parameter update, not per forward."""
    d_in, f1 = params["w1"].shape
    f2 = params["w2"].shape[1]
    na = params["w3"].shape[1]
    f1_p = _round_up(f1, LANE)
    f2_p = _round_up(f2, LANE)

    def pad2(a, rows, cols, dtype):
        a = a.astype(dtype)
        return jnp.pad(a, ((0, rows - a.shape[0]), (0, cols - a.shape[1])))

    return {
        "w1": pad2(params["w1"], d_in, f1_p, jnp.bfloat16),
        "b1": pad2(params["b1"], 1, f1_p, jnp.float32),
        "w2": pad2(params["w2"], f1_p, f2_p, jnp.bfloat16),
        "b2": pad2(params["b2"], 1, f2_p, jnp.float32),
        "w3": pad2(params["w3"], f2_p, na, jnp.bfloat16),
        "b3": params["b3"].astype(jnp.float32),
    }


def dqn_forward(state, prepared, tile_b=256):
    """state: (B, input_dim) float. prepared: output of prepare_params()."""
    B, d_in = state.shape
    na = prepared["w3"].shape[1]
    assert prepared["w1"].shape[0] == d_in

    # Batch tiling: pad only to the bf16 sublane granule; pick the tile so the
    # grid has >= 2 steps whenever B allows (fills both TCs on v7x; no-op on
    # v5e/v6e).  For large B, sweep tile_b up to 512 (VMEM cost is tiny).
    b_pad = _round_up(B, SUBLANE_BF16)
    tb = min(tile_b, max(SUBLANE_BF16, _round_up((B + 1) // 2, SUBLANE_BF16)))
    tb = min(tb, b_pad)
    nb = pl.cdiv(b_pad, tb)

    x = state.astype(jnp.bfloat16)
    if b_pad != B:
        x = jnp.pad(x, ((0, b_pad - B), (0, 0)))

    w1, b1 = prepared["w1"], prepared["b1"]
    w2, b2 = prepared["w2"], prepared["b2"]
    w3, b3 = prepared["w3"], prepared["b3"]
    f1_p, f2_p = w1.shape[1], w2.shape[1]

    # Weights/biases: full-array block with a constant index_map -> DMA'd once,
    # single-buffered, resident in VMEM across all batch tiles.
    resident = lambda a: pl.BlockSpec(a.shape, lambda i: (0, 0))

    # Explicit VMEM budget: resident weights/biases + double-buffered x/out
    # tiles + f32 intermediates, 2x headroom.  Scoped defaults are only
    # 16/32/32 MiB on v5e/v6e/v7x (physical 128/128/64 MiB); setting this
    # keeps large fc dims off the spill path.
    resident_bytes = sum(int(a.size) * a.dtype.itemsize
                         for a in (w1, b1, w2, b2, w3, b3))
    tile_bytes = 2 * (tb * d_in * 2 + tb * na * 4)      # double-buffered in/out
    act_bytes = tb * (f1_p + f2_p) * 4                  # f32 intermediates
    vmem_limit = min(max(2 * (resident_bytes + tile_bytes + act_bytes) + (4 << 20),
                         32 << 20), 127 << 20)

    flops = 2 * b_pad * (d_in * f1_p + f1_p * f2_p + f2_p * na)
    bytes_accessed = int(x.size) * 2 + resident_bytes + b_pad * na * 4

    out = pl.pallas_call(
        dqn_kernel,
        out_shape=jax.ShapeDtypeStruct((b_pad, na), jnp.float32),
        grid_spec=pltpu.PrefetchScalarGridSpec(
            num_scalar_prefetch=0,
            grid=(nb,),
            in_specs=[
                pl.BlockSpec((tb, d_in), lambda i: (i, 0)),  # state tile (pipelined)
                resident(w1), resident(b1),
                resident(w2), resident(b2),
                resident(w3), resident(b3),
            ],
            out_specs=pl.BlockSpec((tb, na), lambda i: (i, 0)),
        ),
        compiler_params=pltpu.CompilerParams(
            dimension_semantics=("parallel",),
            vmem_limit_bytes=int(vmem_limit),
        ),
        cost_estimate=pl.CostEstimate(
            flops=flops, transcendentals=0, bytes_accessed=bytes_accessed),
    )(x, w1, b1, w2, b2, w3, b3)

    return out[:B]


if __name__ == "__main__":
    # DeepQNetwork(input_dims=(8,), fc1=32, fc2=32, n_actions=4), batch=2
    B, input_dim, fc1_dims, fc2_dims, n_actions = 2, 8, 32, 32, 4

    key = jax.random.PRNGKey(0)
    k_state, k_params = jax.random.split(key)
    state = jax.random.normal(k_state, (B, input_dim), jnp.float32)

    params = init_params(k_params, input_dim, fc1_dims, fc2_dims, n_actions)
    prepared = jax.block_until_ready(prepare_params(params))  # one-time pad/cast

    fwd = jax.jit(dqn_forward)
    actions = fwd(state, prepared)
    jax.block_until_ready(actions)
    assert actions.shape == (B, n_actions)
    assert actions.dtype == jnp.float32

    # Reference matching the kernel's bf16-operand / f32-accumulate math.
    xb = state.astype(jnp.bfloat16)
    h1 = jnp.maximum(
        jnp.dot(xb, params["w1"].astype(jnp.bfloat16),
                preferred_element_type=jnp.float32) + params["b1"], 0.0
    ).astype(jnp.bfloat16)
    h2 = jnp.maximum(
        jnp.dot(h1, params["w2"].astype(jnp.bfloat16),
                preferred_element_type=jnp.float32) + params["b2"], 0.0
    ).astype(jnp.bfloat16)
    ref_bf16 = jnp.dot(h2, params["w3"].astype(jnp.bfloat16),
                       preferred_element_type=jnp.float32) + params["b3"]
    assert jnp.allclose(actions, ref_bf16, atol=1e-4, rtol=1e-4), \
        "mismatch vs bf16 reference"

    # Loose check against the full-f32 PyTorch-equivalent forward.
    ref = jnp.maximum(state @ params["w1"] + params["b1"], 0.0)
    ref = jnp.maximum(ref @ params["w2"] + params["b2"], 0.0)
    ref = ref @ params["w3"] + params["b3"]
    assert jnp.allclose(actions, ref, atol=5e-2), "mismatch vs f32 reference"

    print("KERNEL_OK")
</pallas_src>

<mosaic_0001>
module attributes {stable_mosaic.version = 11 : i64} {
  func.func @dqn_kernel(%arg0: i32, %arg1: memref<16x8xbf16, #tpu.memory_space<vmem>>, %arg2: memref<8x128xbf16, #tpu.memory_space<vmem>>, %arg3: memref<1x128xf32, #tpu.memory_space<vmem>>, %arg4: memref<128x128xbf16, #tpu.memory_space<vmem>>, %arg5: memref<1x128xf32, #tpu.memory_space<vmem>>, %arg6: memref<128x4xbf16, #tpu.memory_space<vmem>>, %arg7: memref<1x4xf32, #tpu.memory_space<vmem>>, %arg8: memref<16x4xf32, #tpu.memory_space<vmem>>) attributes {dimension_semantics = [#tpu.dimension_semantics<parallel>], iteration_bounds = array<i64: 1>, scalar_prefetch = 0 : i64, scratch_operands = 0 : i64, tpu.core_type = #tpu.core_type<tc>, window_params = [{transform_indices = @transform_0, window_bounds = array<i64: 16, 8>}, {pipeline_mode = #tpu.pipeline_mode<synchronous>, transform_indices = @transform_1, window_bounds = array<i64: 8, 128>}, {pipeline_mode = #tpu.pipeline_mode<synchronous>, transform_indices = @transform_2, window_bounds = array<i64: 1, 128>}, {pipeline_mode = #tpu.pipeline_mode<synchronous>, transform_indices = @transform_3, window_bounds = array<i64: 128, 128>}, {pipeline_mode = #tpu.pipeline_mode<synchronous>, transform_indices = @transform_4, window_bounds = array<i64: 1, 128>}, {pipeline_mode = #tpu.pipeline_mode<synchronous>, transform_indices = @transform_5, window_bounds = array<i64: 128, 4>}, {pipeline_mode = #tpu.pipeline_mode<synchronous>, transform_indices = @transform_6, window_bounds = array<i64: 1, 4>}, {transform_indices = @transform_7, window_bounds = array<i64: 16, 4>}]} {
    %c0 = arith.constant 0 : index
    %c0_0 = arith.constant 0 : index
    %0 = vector.load %arg1[%c0, %c0_0] : memref<16x8xbf16, #tpu.memory_space<vmem>>, vector<16x8xbf16>
    %c0_1 = arith.constant 0 : index
    %c0_2 = arith.constant 0 : index
    %1 = vector.load %arg2[%c0_1, %c0_2] : memref<8x128xbf16, #tpu.memory_space<vmem>>, vector<8x128xbf16>
    %cst = arith.constant dense<0.000000e+00> : vector<16x128xf32>
    %2 = tpu.matmul %0, %1, %cst {dimension_numbers = #tpu.dot_dimension_numbers<[1], [0], [0], [1], [0, 0, 1, 1], [], []>} : vector<16x8xbf16>, vector<8x128xbf16>, vector<16x128xf32> -> vector<16x128xf32>
    %c0_3 = arith.constant 0 : index
    %c0_4 = arith.constant 0 : index
    %3 = vector.load %arg3[%c0_3, %c0_4] : memref<1x128xf32, #tpu.memory_space<vmem>>, vector<1x128xf32>
    %4 = vector.broadcast %3 : vector<1x128xf32> to vector<16x128xf32>
    %5 = arith.addf %2, %4 : vector<16x128xf32>
    %cst_5 = arith.constant 0.000000e+00 : f32
    %6 = vector.broadcast %cst_5 : f32 to vector<16x128xf32>
    %7 = arith.maximumf %5, %6 : vector<16x128xf32>
    %8 = arith.truncf %7 : vector<16x128xf32> to vector<16x128xbf16>
    %c0_6 = arith.constant 0 : index
    %c0_7 = arith.constant 0 : index
    %9 = vector.load %arg4[%c0_6, %c0_7] : memref<128x128xbf16, #tpu.memory_space<vmem>>, vector<128x128xbf16>
    %cst_8 = arith.constant dense<0.000000e+00> : vector<16x128xf32>
    %10 = tpu.matmul %8, %9, %cst_8 {dimension_numbers = #tpu.dot_dimension_numbers<[1], [0], [0], [1], [0, 0, 1, 1], [], []>} : vector<16x128xbf16>, vector<128x128xbf16>, vector<16x128xf32> -> vector<16x128xf32>
    %c0_9 = arith.constant 0 : index
    %c0_10 = arith.constant 0 : index
    %11 = vector.load %arg5[%c0_9, %c0_10] : memref<1x128xf32, #tpu.memory_space<vmem>>, vector<1x128xf32>
    %12 = vector.broadcast %11 : vector<1x128xf32> to vector<16x128xf32>
    %13 = arith.addf %10, %12 : vector<16x128xf32>
    %cst_11 = arith.constant 0.000000e+00 : f32
    %14 = vector.broadcast %cst_11 : f32 to vector<16x128xf32>
    %15 = arith.maximumf %13, %14 : vector<16x128xf32>
    %16 = arith.truncf %15 : vector<16x128xf32> to vector<16x128xbf16>
    %c0_12 = arith.constant 0 : index
    %c0_13 = arith.constant 0 : index
    %17 = vector.load %arg6[%c0_12, %c0_13] : memref<128x4xbf16, #tpu.memory_space<vmem>>, vector<128x4xbf16>
    %cst_14 = arith.constant dense<0.000000e+00> : vector<16x4xf32>
    %18 = tpu.matmul %16, %17, %cst_14 {dimension_numbers = #tpu.dot_dimension_numbers<[1], [0], [0], [1], [0, 0, 1, 1], [], []>} : vector<16x128xbf16>, vector<128x4xbf16>, vector<16x4xf32> -> vector<16x4xf32>
    %c0_15 = arith.constant 0 : index
    %c0_16 = arith.constant 0 : index
    %19 = vector.load %arg7[%c0_15, %c0_16] : memref<1x4xf32, #tpu.memory_space<vmem>>, vector<1x4xf32>
    %20 = vector.broadcast %19 : vector<1x4xf32> to vector<16x4xf32>
    %21 = arith.addf %18, %20 : vector<16x4xf32>
    %c0_17 = arith.constant 0 : index
    %c0_18 = arith.constant 0 : index
    %22 = vector.load %arg8[%c0_17, %c0_18] : memref<16x4xf32, #tpu.memory_space<vmem>>, vector<16x4xf32>
    tpu.vector_store %arg8[%c0_17, %c0_18], %21 {strides = array<i32>} : memref<16x4xf32, #tpu.memory_space<vmem>>, vector<16x4xf32>,
    return
  }
  func.func @transform_0(%arg0: i32) -> (i32, i32) {
    %c0_i32 = arith.constant 0 : i32
    %c0_i32_0 = arith.constant 0 : i32
    return %arg0, %c0_i32 : i32, i32
  }
  func.func @transform_1(%arg0: i32) -> (i32, i32) {
    %c0_i32 = arith.constant 0 : i32
    %c0_i32_0 = arith.constant 0 : i32
    %c0_i32_1 = arith.constant 0 : i32
    return %c0_i32, %c0_i32_0 : i32, i32
  }
  func.func @transform_2(%arg0: i32) -> (i32, i32) {
    %c0_i32 = arith.constant 0 : i32
    %c0_i32_0 = arith.constant 0 : i32
    %c0_i32_1 = arith.constant 0 : i32
    return %c0_i32, %c0_i32_0 : i32, i32
  }
  func.func @transform_3(%arg0: i32) -> (i32, i32) {
    %c0_i32 = arith.constant 0 : i32
    %c0_i32_0 = arith.constant 0 : i32
    %c0_i32_1 = arith.constant 0 : i32
    return %c0_i32, %c0_i32_0 : i32, i32
  }
  func.func @transform_4(%arg0: i32) -> (i32, i32) {
    %c0_i32 = arith.constant 0 : i32
    %c0_i32_0 = arith.constant 0 : i32
    %c0_i32_1 = arith.constant 0 : i32
    return %c0_i32, %c0_i32_0 : i32, i32
  }
  func.func @transform_5(%arg0: i32) -> (i32, i32) {
    %c0_i32 = arith.constant 0 : i32
    %c0_i32_0 = arith.constant 0 : i32
    %c0_i32_1 = arith.constant 0 : i32
    return %c0_i32, %c0_i32_0 : i32, i32
  }
  func.func @transform_6(%arg0: i32) -> (i32, i32) {
    %c0_i32 = arith.constant 0 : i32
    %c0_i32_0 = arith.constant 0 : i32
    %c0_i32_1 = arith.constant 0 : i32
    return %c0_i32, %c0_i32_0 : i32, i32
  }
  func.func @transform_7(%arg0: i32) -> (i32, i32) {
    %c0_i32 = arith.constant 0 : i32
    %c0_i32_0 = arith.constant 0 : i32
    return %arg0, %c0_i32 : i32, i32
  }
}

</mosaic_0001>

<llo_original>
// kernel: dqn_forward.1
$region0: #{dqn_forward.1}
  #allocation0 [shape = 'u32[]', space=smem, size = 0x4, offset = 0x4, fixed_abs, tag = 'smem constant byte address 0x4 - core index']
  #allocation1 [shape = 'u32[144,128]{1,0:T(1,128)}', space=vmem, size = 0x12000, scoped, tag = 'internal scratch']
  %s0 = inlined_call_operand.vmem [shape: bf16[16,8], index: 0, kind: input, shape index: {}]
  %s1 = inlined_call_operand.vmem [shape: bf16[8,128], index: 1, kind: input, shape index: {}]
  %s2 = inlined_call_operand.vmem [shape: f32[1,128], index: 2, kind: input, shape index: {}]
  %s3 = inlined_call_operand.vmem [shape: bf16[128,128], index: 3, kind: input, shape index: {}]
  %s4 = inlined_call_operand.vmem [shape: f32[1,128], index: 4, kind: input, shape index: {}]
  %s5 = inlined_call_operand.vmem [shape: bf16[128,4], index: 5, kind: input, shape index: {}]
  %s6 = inlined_call_operand.vmem [shape: f32[1,4], index: 6, kind: input, shape index: {}]
  %s7 = inlined_call_operand.vmem [shape: f32[16,4], index: 7, kind: output, shape index: {}]
  %s8 = sld [smem:[#allocation0]]
  $region38: #{dqn_forward.1} parent=0
    _
  %s10 = ssub.s32 1, %s8
  %s11 = scalar_select 0, %s10, %s8
  // Predicated region
  $region2: #{dqn_forward.1} parent=0 // pred_check
    _
  $region3: #{dqn_forward.1} parent=0 // pred_check_branch
    %13 = sbr.rel (0) target = $region5
  $region4: #{dqn_forward.1} parent=0 // pred_region
    _
  $region5: #{dqn_forward.1} parent=0 // pred_fallthru
    _
  // Predicated region
  $region6: #{dqn_forward.1} parent=0 // pred_check
    _
  $region7: #{dqn_forward.1} parent=0 // pred_check_branch
    %15 = sbr.rel (0) target = $region9
  $region8: #{dqn_forward.1} parent=0 // pred_region
    _
  $region9: #{dqn_forward.1} parent=0 // pred_fallthru
    _
  // Predicated region
  $region10: #{dqn_forward.1} parent=0 // pred_check
    _
  $region11: #{dqn_forward.1} parent=0 // pred_check_branch
    %17 = sbr.rel (0) target = $region13
  $region12: #{dqn_forward.1} parent=0 // pred_region
    _
  $region13: #{dqn_forward.1} parent=0 // pred_fallthru
    _
  // Predicated region
  $region14: #{dqn_forward.1} parent=0 // pred_check
    _
  $region15: #{dqn_forward.1} parent=0 // pred_check_branch
    %19 = sbr.rel (0) target = $region17
  $region16: #{dqn_forward.1} parent=0 // pred_region
    _
  $region17: #{dqn_forward.1} parent=0 // pred_fallthru
    _
  // Predicated region
  $region18: #{dqn_forward.1} parent=0 // pred_check
    _
  $region19: #{dqn_forward.1} parent=0 // pred_check_branch
    %21 = sbr.rel (0) target = $region21
  $region20: #{dqn_forward.1} parent=0 // pred_region
    _
  $region21: #{dqn_forward.1} parent=0 // pred_fallthru
    _
  // Predicated region
  $region22: #{dqn_forward.1} parent=0 // pred_check
    _
  $region23: #{dqn_forward.1} parent=0 // pred_check_branch
    %23 = sbr.rel (0) target = $region25
  $region24: #{dqn_forward.1} parent=0 // pred_region
    _
  $region25: #{dqn_forward.1} parent=0 // pred_fallthru
    _
  // Predicated region
  $region26: #{dqn_forward.1} parent=0 // pred_check
    _
  $region27: #{dqn_forward.1} parent=0 // pred_check_branch
    %25 = sbr.rel (0) target = $region29
  $region28: #{dqn_forward.1} parent=0 // pred_region
    _
  $region29: #{dqn_forward.1} parent=0 // pred_fallthru
    _
  %v27 = vld [vmem:[%s0] sm:$0xf]
  %v28 = vld [vmem:[%s0 + $0x4] sm:$0xf]
  %v29 = vld [vmem:[%s1] sm:$0xf]
  %v30 = vld [vmem:[%s2] sm:$0x1]
  %v32 = vlaneseq
  %v33 = vshrl.u32 %v32, 7
  %v34 = vsub.s32 0, %v33
  %v35 = vrot.slane %v30, %v34
  %v39 = vunpack.c.l.b16 %v27
  %v40 = vunpack.c.l.b16 %v28
  %v41 = vpack.c.b16 %v40, %v39
  %vm42 = vcmask 64512
  %v44 = vsel %vm42, %v41, 0
  %vm46 = vcmask 1043456
  %v48 = vsel %vm46, %v29, 0
  %50 = vmatprep.subr.bf16.mxu0 0
  %51 = vmatpush1.bf16.msra.mxu0 %v48
  %52 = vmatprep.subr.bf16.mxu0 0
  %53 = vmatpush1.bf16.msra.mxu0 0
  %54 = vmatprep.subr.bf16.mxu0 0
  %55 = vmatpush1.bf16.msra.mxu0 0
  %56 = vmatprep.subr.bf16.mxu0 0
  %57 = vmatpush1.bf16.msra.mxu0 0
  %58 = vmatprep.subr.bf16.mxu0 0
  %59 = vmatpush1.bf16.msra.mxu0 0
  %60 = vmatprep.subr.bf16.mxu0 0
  %61 = vmatpush1.bf16.msra.mxu0 0
  %62 = vmatprep.subr.bf16.mxu0 0
  %63 = vmatpush1.bf16.msra.mxu0 0
  %64 = vmatprep.subr.bf16.mxu0 0
  %65 = vmatpush1.bf16.msra.mxu0 0
  %66 = vmatprep.subr.bf16.mxu0 0
  %67 = vmatpush1.bf16.msra.mxu0 0
  %68 = vmatprep.subr.bf16.mxu0 0
  %69 = vmatpush1.bf16.msra.mxu0 0
  %70 = vmatprep.subr.bf16.mxu0 0
  %71 = vmatpush1.bf16.msra.mxu0 0
  %72 = vmatprep.subr.bf16.mxu0 0
  %73 = vmatpush1.bf16.msra.mxu0 0
  %74 = vmatprep.subr.bf16.mxu0 0
  %75 = vmatpush1.bf16.msra.mxu0 0
  %76 = vmatprep.subr.bf16.mxu0 0
  %77 = vmatpush1.bf16.msra.mxu0 0
  %78 = vmatprep.subr.bf16.mxu0 0
  %79 = vmatpush1.bf16.msra.mxu0 0
  %80 = vmatprep.subr.bf16.mxu0 0
  %81 = vmatpush1.bf16.msra.mxu0 0
  %82 = vmatprep.mubr.bf16.mxu0 0
  %83 = vmatmul.mubr.bf16.gmra.mrb[0].mxu0 %v44
  %v84 = vpop.f32.mrb[0].mxu0
  %v85 = vadd.f32 %v35, %v84
  %v86 = vpop.f32.mrb[0].mxu0
  %v87 = vpop.f32.mrb[0].mxu0
  %v88 = vadd.f32 %v35, %v87
  %v89 = vpop.f32.mrb[0].mxu0
  %90 = vdwg.mxu0
  %v91 = vmax.f32 %v85, 0.0
  %v92 = vmax.f32 %v88, 0.0
  %v93 = vpack.c.bf16 %v92, %v91
  %v94 = vld [vmem:[%s3] sm:$0xf]
  %v95 = vld [vmem:[%s3 + $0x4] sm:$0xf]
  %v96 = vld [vmem:[%s3 + $0x8] sm:$0xf]
  %v97 = vld [vmem:[%s3 + $0xc] sm:$0xf]
  %v98 = vld [vmem:[%s3 + $0x10] sm:$0xf]
  %v99 = vld [vmem:[%s3 + $0x14] sm:$0xf]
  %v100 = vld [vmem:[%s3 + $0x18] sm:$0xf]
  %v101 = vld [vmem:[%s3 + $0x1c] sm:$0xf]
  %v102 = vld [vmem:[%s3 + $0x20] sm:$0xf]
  %v103 = vld [vmem:[%s3 + $0x24] sm:$0xf]
  %v104 = vld [vmem:[%s3 + $0x28] sm:$0xf]
  %v105 = vld [vmem:[%s3 + $0x2c] sm:$0xf]
  %v106 = vld [vmem:[%s3 + $0x30] sm:$0xf]
  %v107 = vld [vmem:[%s3 + $0x34] sm:$0xf]
  %v108 = vld [vmem:[%s3 + $0x38] sm:$0xf]
  %v109 = vld [vmem:[%s3 + $0x3c] sm:$0xf]
  %v110 = vld [vmem:[%s4] sm:$0x1]
  %v112 = vlaneseq
  %v113 = vshrl.u32 %v112, 7
  %v114 = vsub.s32 0, %v113
  %v115 = vrot.slane %v110, %v114
  %v133 = vunpack.c.l.b16 %v94
  %v134 = vunpack.c.l.b16 %v95
  %v135 = vunpack.c.l.b16 %v96
  %v136 = vunpack.c.l.b16 %v97
  %v137 = vunpack.c.l.b16 %v98
  %v138 = vunpack.c.l.b16 %v99
  %v139 = vunpack.c.l.b16 %v100
  %v140 = vunpack.c.l.b16 %v101
  %v141 = vunpack.c.l.b16 %v102
  %v142 = vunpack.c.l.b16 %v103
  %v143 = vunpack.c.l.b16 %v104
  %v144 = vunpack.c.l.b16 %v105
  %v145 = vunpack.c.l.b16 %v106
  %v146 = vunpack.c.l.b16 %v107
  %v147 = vunpack.c.l.b16 %v108
  %v148 = vunpack.c.l.b16 %v109
  %v149 = vpack.c.b16 %v134, %v133
  %v150 = vpack.c.b16 %v136, %v135
  %v151 = vpack.c.b16 %v138, %v137
  %v152 = vpack.c.b16 %v140, %v139
  %v153 = vpack.c.b16 %v142, %v141
  %v154 = vpack.c.b16 %v144, %v143
  %v155 = vpack.c.b16 %v146, %v145
  %v156 = vpack.c.b16 %v148, %v147
  %165 = vmatprep.subr.bf16.mxu0 0
  %166 = vmatpush1.bf16.msra.mxu0 %v149
  %167 = vmatprep.subr.bf16.mxu0 0
  %168 = vmatpush1.bf16.msra.mxu0 %v150
  %169 = vmatprep.subr.bf16.mxu0 0
  %170 = vmatpush1.bf16.msra.mxu0 %v151
  %171 = vmatprep.subr.bf16.mxu0 0
  %172 = vmatpush1.bf16.msra.mxu0 %v152
  %173 = vmatprep.subr.bf16.mxu0 0
  %174 = vmatpush1.bf16.msra.mxu0 %v153
  %175 = vmatprep.subr.bf16.mxu0 0
  %176 = vmatpush1.bf16.msra.mxu0 %v154
  %177 = vmatprep.subr.bf16.mxu0 0
  %178 = vmatpush1.bf16.msra.mxu0 %v155
  %179 = vmatprep.subr.bf16.mxu0 0
  %180 = vmatpush1.bf16.msra.mxu0 %v156
  %181 = vmatprep.subr.bf16.mxu0 0
  %182 = vmatpush1.bf16.msra.mxu0 0
  %183 = vmatprep.subr.bf16.mxu0 0
  %184 = vmatpush1.bf16.msra.mxu0 0
  %185 = vmatprep.subr.bf16.mxu0 0
  %186 = vmatpush1.bf16.msra.mxu0 0
  %187 = vmatprep.subr.bf16.mxu0 0
  %188 = vmatpush1.bf16.msra.mxu0 0
  %189 = vmatprep.subr.bf16.mxu0 0
  %190 = vmatpush1.bf16.msra.mxu0 0
  %191 = vmatprep.subr.bf16.mxu0 0
  %192 = vmatpush1.bf16.msra.mxu0 0
  %193 = vmatprep.subr.bf16.mxu0 0
  %194 = vmatpush1.bf16.msra.mxu0 0
  %195 = vmatprep.subr.bf16.mxu0 0
  %196 = vmatpush1.bf16.msra.mxu0 0
  %197 = vmatprep.mubr.bf16.mxu0 0
  %198 = vmatmul.mubr.bf16.gmra.mrb[0].mxu0 %v93
  %v199 = vpop.f32.mrb[0].mxu0
  %v200 = vadd.f32 %v115, %v199
  %v201 = vpop.f32.mrb[0].mxu0
  %v202 = vpop.f32.mrb[0].mxu0
  %v203 = vadd.f32 %v115, %v202
  %v204 = vpop.f32.mrb[0].mxu0
  %205 = vdwg.mxu0
  %v206 = vmax.f32 %v200, 0.0
  %v207 = vmax.f32 %v203, 0.0
  %v208 = vpack.c.bf16 %v207, %v206
  %v209 = vld [vmem:[%s5] sm:$0xf]
  %v210 = vld [vmem:[%s5 + $0x4] sm:$0xf]
  %v211 = vld [vmem:[%s5 + $0x8] sm:$0xf]
  %v212 = vld [vmem:[%s5 + $0xc] sm:$0xf]
  %v213 = vld [vmem:[%s5 + $0x10] sm:$0xf]
  %v214 = vld [vmem:[%s5 + $0x14] sm:$0xf]
  %v215 = vld [vmem:[%s5 + $0x18] sm:$0xf]
  %v216 = vld [vmem:[%s5 + $0x1c] sm:$0xf]
  %v217 = vld [vmem:[%s5 + $0x20] sm:$0xf]
  %v218 = vld [vmem:[%s5 + $0x24] sm:$0xf]
  %v219 = vld [vmem:[%s5 + $0x28] sm:$0xf]
  %v220 = vld [vmem:[%s5 + $0x2c] sm:$0xf]
  %v221 = vld [vmem:[%s5 + $0x30] sm:$0xf]
  %v222 = vld [vmem:[%s5 + $0x34] sm:$0xf]
  %v223 = vld [vmem:[%s5 + $0x38] sm:$0xf]
  %v224 = vld [vmem:[%s5 + $0x3c] sm:$0xf]
  %v225 = vld [vmem:[%s6] sm:$0x1]
  %v227 = vlaneseq
  %v228 = vshrl.u32 %v227, 7
  %v229 = vsub.s32 0, %v228
  %v230 = vrot.slane %v225, %v229
  %v248 = vunpack.c.l.b16 %v209
  %v249 = vunpack.c.l.b16 %v210
  %v250 = vunpack.c.l.b16 %v211
  %v251 = vunpack.c.l.b16 %v212
  %v252 = vunpack.c.l.b16 %v213
  %v253 = vunpack.c.l.b16 %v214
  %v254 = vunpack.c.l.b16 %v215
  %v255 = vunpack.c.l.b16 %v216
  %v256 = vunpack.c.l.b16 %v217
  %v257 = vunpack.c.l.b16 %v218
  %v258 = vunpack.c.l.b16 %v219
  %v259 = vunpack.c.l.b16 %v220
  %v260 = vunpack.c.l.b16 %v221
  %v261 = vunpack.c.l.b16 %v222
  %v262 = vunpack.c.l.b16 %v223
  %v263 = vunpack.c.l.b16 %v224
  %v264 = vpack.c.b16 %v249, %v248
  %v265 = vpack.c.b16 %v251, %v250
  %v266 = vpack.c.b16 %v253, %v252
  %v267 = vpack.c.b16 %v255, %v254
  %v268 = vpack.c.b16 %v257, %v256
  %v269 = vpack.c.b16 %v259, %v258
  %v270 = vpack.c.b16 %v261, %v260
  %v271 = vpack.c.b16 %v263, %v262
  %280 = vmatprep.subr.bf16.mxu0 0
  %281 = vmatpush1.bf16.msra.mxu0 %v264
  %282 = vmatprep.subr.bf16.mxu0 0
  %283 = vmatpush1.bf16.msra.mxu0 %v265
  %284 = vmatprep.subr.bf16.mxu0 0
  %285 = vmatpush1.bf16.msra.mxu0 %v266
  %286 = vmatprep.subr.bf16.mxu0 0
  %287 = vmatpush1.bf16.msra.mxu0 %v267
  %288 = vmatprep.subr.bf16.mxu0 0
  %289 = vmatpush1.bf16.msra.mxu0 %v268
  %290 = vmatprep.subr.bf16.mxu0 0
  %291 = vmatpush1.bf16.msra.mxu0 %v269
  %292 = vmatprep.subr.bf16.mxu0 0
  %293 = vmatpush1.bf16.msra.mxu0 %v270
  %294 = vmatprep.subr.bf16.mxu0 0
  %295 = vmatpush1.bf16.msra.mxu0 %v271
  %296 = vmatprep.subr.bf16.mxu0 0
  %297 = vmatpush1.bf16.msra.mxu0 0
  %298 = vmatprep.subr.bf16.mxu0 0
  %299 = vmatpush1.bf16.msra.mxu0 0
  %300 = vmatprep.subr.bf16.mxu0 0
  %301 = vmatpush1.bf16.msra.mxu0 0
  %302 = vmatprep.subr.bf16.mxu0 0
  %303 = vmatpush1.bf16.msra.mxu0 0
  %304 = vmatprep.subr.bf16.mxu0 0
  %305 = vmatpush1.bf16.msra.mxu0 0
  %306 = vmatprep.subr.bf16.mxu0 0
  %307 = vmatpush1.bf16.msra.mxu0 0
  %308 = vmatprep.subr.bf16.mxu0 0
  %309 = vmatpush1.bf16.msra.mxu0 0
  %310 = vmatprep.subr.bf16.mxu0 0
  %311 = vmatpush1.bf16.msra.mxu0 0
  %312 = vmatprep.mubr.bf16.mxu0 0
  %313 = vmatmul.mubr.bf16.gmra.mrb[0].mxu0 %v208
  %v314 = vpop.f32.mrb[0].mxu0
  %v315 = vadd.f32 %v230, %v314
  %v316 = vpop.f32.mrb[0].mxu0
  %v317 = vpop.f32.mrb[0].mxu0
  %v318 = vadd.f32 %v230, %v317
  %v319 = vpop.f32.mrb[0].mxu0
  %320 = vdwg.mxu0
  %vm321 = vcmask 31744
  %322 = vst.msk [vmem:[%s7] sm:$0xff] %vm321, %v315
  %323 = vst.msk [vmem:[%s7 + $0x8] sm:$0xff] %vm321, %v318
  // Predicated region
  $region30: #{dqn_forward.1} parent=0 // pred_check
    _
  $region31: #{dqn_forward.1} parent=0 // pred_check_branch
    %325 = sbr.rel (0) target = $region33
  $region32: #{dqn_forward.1} parent=0 // pred_region
    _
  $region33: #{dqn_forward.1} parent=0 // pred_fallthru
    _
  // Predicated region
  $region34: #{dqn_forward.1} parent=0 // pred_check
    _
  $region35: #{dqn_forward.1} parent=0 // pred_check_branch
    %327 = sbr.rel (0) target = $region37
  $region36: #{dqn_forward.1} parent=0 // pred_region
    _
  $region37: #{dqn_forward.1} parent=0 // pred_fallthru
    _

</llo_original>
